<compile_context>
chip_gen: v7x
topology: tpu7x:2x2x1
jax: 0.10.0
libtpu: 0.0.40
codegen_flags: <defaults>
</compile_context>

<pallas_src>
import jax
import jax.numpy as jnp
from jax import lax
from jax.experimental import pallas as pl
from jax.experimental.pallas import tpu as pltpu


def _make_cam_kernel(matmul_dtype):
    def cam_kernel(gamma_ref, x_ref, o_ref, energy_ref):
        p = pl.program_id(1)            # 0: accumulate energy, 1: apply attention
        n = pl.program_id(2)            # spatial-chunk index
        n_last = pl.num_programs(2) - 1

        x = x_ref[0]                    # (C, TN), input dtype
        x_mm = x.astype(matmul_dtype)   # MXU operand (bf16 by default)

        @pl.when((p == 0) & (n == 0))
        def _init():
            energy_ref[...] = jnp.zeros_like(energy_ref)

        @pl.when(p == 0)
        def _accumulate():
            # energy += x_chunk @ x_chunk^T (contract the spatial axis), f32 acc.
            energy_ref[...] += lax.dot_general(
                x_mm, x_mm,
                dimension_numbers=(((1,), (1,)), ((), ())),
                preferred_element_type=jnp.float32,
            )

        @pl.when((p == 0) & (n == n_last))
        def _softmax():
            # softmax(rowmax(E) - E) == exp(rowmin(E) - E) / rowsum: one row-min
            # reduce replaces the row-max pass + second stabilizing-max pass.
            energy = energy_ref[...]
            e = jnp.exp(jnp.min(energy, axis=-1, keepdims=True) - energy)
            inv = pl.reciprocal(jnp.sum(e, axis=-1, keepdims=True), approx=True)
            energy_ref[...] = e * inv   # overwrite scratch with attention in place

        @pl.when(p == 1)
        def _apply():
            attn = energy_ref[...].astype(matmul_dtype)
            out = jnp.dot(attn, x_mm, preferred_element_type=jnp.float32)  # (C, TN)
            o_ref[0] = (gamma_ref[0] * out + x.astype(jnp.float32)).astype(o_ref.dtype)

    return cam_kernel


def _pick_block_n(C, n_pad, max_block_n, vmem_budget_bytes):
    """Largest 128-multiple spatial tile that divides the padded N, respects the
    VMEM budget (double-buffered in/out f32 tiles + temporaries + (C,C) scratch)
    and is <= max_block_n."""
    fixed = 12 * C * C                 # (C,C) f32 scratch + softmax temporaries
    per_col = 24 * C                   # dbl-buffered f32 in/out tiles + bf16/f32 temps
    budget_cols = max(128, (vmem_budget_bytes - fixed) // per_col)
    t = min(n_pad, max_block_n, (budget_cols // 128) * 128)
    t = max(128, (t // 128) * 128)
    while n_pad % t:
        t -= 128
    return t


def cam_forward(x, gamma, *, matmul_dtype=jnp.bfloat16, max_block_n=2048,
                vmem_budget_bytes=20 * 1024 * 1024):
    """x: (B, C, H, W); gamma: (1,). Returns gamma * (softmax-attn @ X) + X."""
    B, C, H, W = x.shape
    N = H * W
    x_flat = x.reshape(B, C, N)

    # Lane-dense padding: N up to a multiple of 128 (zero columns are inert:
    # they don't change X @ X^T nor the valid output columns).
    N_pad = pl.cdiv(N, 128) * 128
    if N_pad != N:
        x_flat = jnp.pad(x_flat, ((0, 0), (0, 0), (0, N_pad - N)))

    TN = _pick_block_n(C, N_pad, max_block_n, vmem_budget_bytes)
    num_chunks = N_pad // TN

    out_flat = pl.pallas_call(
        _make_cam_kernel(matmul_dtype),
        out_shape=jax.ShapeDtypeStruct((B, C, N_pad), x.dtype),
        grid_spec=pltpu.PrefetchScalarGridSpec(
            num_scalar_prefetch=0,
            grid=(B, 2, num_chunks),
            in_specs=[
                pl.BlockSpec(memory_space=pltpu.MemorySpace.SMEM),        # gamma
                pl.BlockSpec((1, C, TN), lambda b, p, n: (b, 0, n)),      # x chunk
            ],
            # During pass 0 the output block index stays at (b, 0, 0), so no
            # (unwritten) tiles are flushed; pass 1 walks the N tiles and each
            # fully-written (C, TN) tile is copied out exactly once.
            out_specs=pl.BlockSpec((1, C, TN), lambda b, p, n: (b, 0, n * p)),
            scratch_shapes=[pltpu.VMEM((C, C), jnp.float32)],             # energy/attn
        ),
        compiler_params=pltpu.CompilerParams(
            # B shards across TensorCores (v7x megacore); pass/chunk axes carry
            # the resident (C, C) scratch and must stay sequential.
            dimension_semantics=("parallel", "arbitrary", "arbitrary"),
            vmem_limit_bytes=48 * 1024 * 1024,   # headroom, still < v7x's 64 MiB
        ),
    )(gamma, x_flat)

    if N_pad != N:
        out_flat = out_flat[:, :, :N]
    return out_flat.reshape(B, C, H, W)


def cam_reference(x, gamma, matmul_dtype=jnp.float32):
    """Pure-JAX reference mirroring the PyTorch forward; matmul_dtype lets us
    compare against the same MXU operand precision the kernel uses."""
    B, C, H, W = x.shape
    v = x.reshape(B, C, -1).astype(jnp.float32)
    q = v.astype(matmul_dtype)
    energy = jnp.einsum("bcn,bdn->bcd", q, q, preferred_element_type=jnp.float32)
    z = jnp.max(energy, axis=-1, keepdims=True) - energy
    attn = jax.nn.softmax(z, axis=-1)
    out = jnp.einsum("bcd,bdn->bcn", attn.astype(matmul_dtype), q,
                     preferred_element_type=jnp.float32)
    return (gamma[0] * out + v).reshape(B, C, H, W).astype(x.dtype)


if __name__ == "__main__":
    key = jax.random.PRNGKey(0)
    B, C, H, W = 2, 4, 16, 16
    x = jax.random.normal(key, (B, C, H, W), dtype=jnp.float32)

    # 1) Module init (gamma = zeros(1)): output must equal the input exactly.
    gamma0 = jnp.zeros((1,), dtype=jnp.float32)
    out0 = jax.block_until_ready(cam_forward(x, gamma0))
    assert out0.shape == (B, C, H, W)
    assert jnp.allclose(out0, x, atol=1e-6, rtol=0)

    # 2) Non-zero gamma: bf16-MXU kernel vs. a reference at matching matmul
    #    operand precision (bf16 operands, f32 accumulation).
    gamma1 = jnp.full((1,), 0.7, dtype=jnp.float32)
    ref1 = cam_reference(x, gamma1, matmul_dtype=jnp.bfloat16)
    out1 = jax.block_until_ready(cam_forward(x, gamma1))
    assert jnp.allclose(out1, ref1, atol=2e-2, rtol=2e-2)

    # 3) Force the multi-chunk path (two N tiles -> accumulated energy in pass 0
    #    and two output tiles in pass 1).
    out2 = jax.block_until_ready(cam_forward(x, gamma1, max_block_n=128))
    assert jnp.allclose(out2, ref1, atol=2e-2, rtol=2e-2)

    # 4) Spatial size that is not a multiple of 128 (exercises zero padding).
    x3 = jax.random.normal(jax.random.PRNGKey(0), (2, 4, 10, 10), dtype=jnp.float32)
    out3 = jax.block_until_ready(cam_forward(x3, gamma1))
    ref3 = cam_reference(x3, gamma1, matmul_dtype=jnp.bfloat16)
    assert jnp.allclose(out3, ref3, atol=2e-2, rtol=2e-2)

    print("KERNEL_OK")
</pallas_src>

<mosaic_0001>
module attributes {stable_mosaic.version = 11 : i64} {
  func.func @cam_kernel(%arg0: i32, %arg1: i32, %arg2: i32, %arg3: memref<1xf32, #tpu.memory_space<smem>>, %arg4: memref<1x4x256xf32, #tpu.memory_space<vmem>>, %arg5: memref<1x4x256xf32, #tpu.memory_space<vmem>>, %arg6: memref<4x4xf32, #tpu.memory_space<vmem>>) attributes {dimension_semantics = [#tpu.dimension_semantics<parallel>, #tpu.dimension_semantics<arbitrary>, #tpu.dimension_semantics<arbitrary>], iteration_bounds = array<i64: 2, 2, 1>, scalar_prefetch = 0 : i64, scratch_operands = 1 : i64, tpu.core_type = #tpu.core_type<tc>, window_params = [{transform_indices = @transform_0, window_bounds = array<i64: 1>}, {transform_indices = @transform_1, window_bounds = array<i64: 1, 4, 256>}, {transform_indices = @transform_2, window_bounds = array<i64: 1, 4, 256>}]} {
    %c0 = arith.constant 0 : index
    %c0_0 = arith.constant 0 : index
    %c0_1 = arith.constant 0 : index
    %0 = vector.load %arg4[%c0, %c0_0, %c0_1] : memref<1x4x256xf32, #tpu.memory_space<vmem>>, vector<1x4x256xf32>
    %1 = vector.shape_cast %0 : vector<1x4x256xf32> to vector<4x256xf32>
    %2 = arith.truncf %1 : vector<4x256xf32> to vector<4x256xbf16>
    %c0_i32 = arith.constant 0 : i32
    %3 = arith.cmpi eq, %arg1, %c0_i32 : i32
    %c0_i32_2 = arith.constant 0 : i32
    %4 = arith.cmpi eq, %arg2, %c0_i32_2 : i32
    %5 = arith.andi %3, %4 : i1
    %6 = arith.extui %5 : i1 to i32
    %c0_i32_3 = arith.constant 0 : i32
    %7 = arith.cmpi ne, %6, %c0_i32_3 : i32
    scf.if %7 {
      %cst = arith.constant 0.000000e+00 : f32
      %19 = vector.broadcast %cst : f32 to vector<4x4xf32>
      %c0_10 = arith.constant 0 : index
      %c0_11 = arith.constant 0 : index
      %20 = vector.load %arg6[%c0_10, %c0_11] : memref<4x4xf32, #tpu.memory_space<vmem>>, vector<4x4xf32>
      tpu.vector_store %arg6[%c0_10, %c0_11], %19 {strides = array<i32>} : memref<4x4xf32, #tpu.memory_space<vmem>>, vector<4x4xf32>,
    } else {
    }
    %c0_i32_4 = arith.constant 0 : i32
    %8 = arith.cmpi eq, %arg1, %c0_i32_4 : i32
    %9 = arith.extui %8 : i1 to i32
    %c0_i32_5 = arith.constant 0 : i32
    %10 = arith.cmpi ne, %9, %c0_i32_5 : i32
    scf.if %10 {
      %c0_10 = arith.constant 0 : index
      %c0_11 = arith.constant 0 : index
      %19 = vector.load %arg6[%c0_10, %c0_11] : memref<4x4xf32, #tpu.memory_space<vmem>>, vector<4x4xf32>
      %cst = arith.constant dense<0.000000e+00> : vector<4x4xf32>
      %20 = tpu.matmul %2, %2, %cst {dimension_numbers = #tpu.dot_dimension_numbers<[1], [1], [0], [0], [0, 0, 1, 0], [], []>} : vector<4x256xbf16>, vector<4x256xbf16>, vector<4x4xf32> -> vector<4x4xf32>
      %21 = arith.addf %19, %20 : vector<4x4xf32>
      %c0_12 = arith.constant 0 : index
      %c0_13 = arith.constant 0 : index
      %22 = vector.load %arg6[%c0_12, %c0_13] : memref<4x4xf32, #tpu.memory_space<vmem>>, vector<4x4xf32>
      tpu.vector_store %arg6[%c0_12, %c0_13], %21 {strides = array<i32>} : memref<4x4xf32, #tpu.memory_space<vmem>>, vector<4x4xf32>,
    } else {
    }
    %c0_i32_6 = arith.constant 0 : i32
    %11 = arith.cmpi eq, %arg1, %c0_i32_6 : i32
    %c0_i32_7 = arith.constant 0 : i32
    %12 = arith.cmpi eq, %arg2, %c0_i32_7 : i32
    %13 = arith.andi %11, %12 : i1
    %14 = arith.extui %13 : i1 to i32
    %c0_i32_8 = arith.constant 0 : i32
    %15 = arith.cmpi ne, %14, %c0_i32_8 : i32
    scf.if %15 {
      %c0_10 = arith.constant 0 : index
      %c0_11 = arith.constant 0 : index
      %19 = vector.load %arg6[%c0_10, %c0_11] : memref<4x4xf32, #tpu.memory_space<vmem>>, vector<4x4xf32>
      %cst = arith.constant dense<0x7F800000> : vector<4xf32>
      %20 = vector.multi_reduction <minimumf>, %19, %cst [1] : vector<4x4xf32> to vector<4xf32>
      %21 = vector.shape_cast %20 : vector<4xf32> to vector<4x1xf32>
      %22 = vector.broadcast %21 : vector<4x1xf32> to vector<4x4xf32>
      %23 = arith.subf %22, %19 : vector<4x4xf32>
      %24 = math.exp %23 : vector<4x4xf32>
      %cst_12 = arith.constant dense<0.000000e+00> : vector<4xf32>
      %25 = vector.multi_reduction <add>, %24, %cst_12 [1] : vector<4x4xf32> to vector<4xf32>
      %26 = vector.shape_cast %25 : vector<4xf32> to vector<4x1xf32>
      %27 = tpu.reciprocal %26 {approx = true} : vector<4x1xf32> -> vector<4x1xf32>
      %28 = vector.broadcast %27 : vector<4x1xf32> to vector<4x4xf32>
      %29 = arith.mulf %24, %28 : vector<4x4xf32>
      %c0_13 = arith.constant 0 : index
      %c0_14 = arith.constant 0 : index
      %30 = vector.load %arg6[%c0_13, %c0_14] : memref<4x4xf32, #tpu.memory_space<vmem>>, vector<4x4xf32>
      tpu.vector_store %arg6[%c0_13, %c0_14], %29 {strides = array<i32>} : memref<4x4xf32, #tpu.memory_space<vmem>>, vector<4x4xf32>,
    } else {
    }
    %c1_i32 = arith.constant 1 : i32
    %16 = arith.cmpi eq, %arg1, %c1_i32 : i32
    %17 = arith.extui %16 : i1 to i32
    %c0_i32_9 = arith.constant 0 : i32
    %18 = arith.cmpi ne, %17, %c0_i32_9 : i32
    scf.if %18 {
      %c0_10 = arith.constant 0 : index
      %c0_11 = arith.constant 0 : index
      %19 = vector.load %arg6[%c0_10, %c0_11] : memref<4x4xf32, #tpu.memory_space<vmem>>, vector<4x4xf32>
      %20 = arith.truncf %19 : vector<4x4xf32> to vector<4x4xbf16>
      %cst = arith.constant dense<0.000000e+00> : vector<4x256xf32>
      %21 = tpu.matmul %20, %2, %cst {dimension_numbers = #tpu.dot_dimension_numbers<[1], [0], [0], [1], [0, 0, 1, 1], [], []>} : vector<4x4xbf16>, vector<4x256xbf16>, vector<4x256xf32> -> vector<4x256xf32>
      %c0_12 = arith.constant 0 : index
      %22 = memref.load %arg3[%c0_12] : memref<1xf32, #tpu.memory_space<smem>>
      %23 = vector.broadcast %22 : f32 to vector<4x256xf32>
      %24 = arith.mulf %23, %21 : vector<4x256xf32>
      %25 = arith.addf %24, %1 : vector<4x256xf32>
      %c0_13 = arith.constant 0 : index
      %c0_14 = arith.constant 0 : index
      %c0_15 = arith.constant 0 : index
      %26 = vector.load %arg5[%c0_13, %c0_14, %c0_15] : memref<1x4x256xf32, #tpu.memory_space<vmem>>, vector<1x4x256xf32>
      %27 = vector.shape_cast %26 : vector<1x4x256xf32> to vector<4x256xf32>
      %28 = vector.shape_cast %25 : vector<4x256xf32> to vector<1x4x256xf32>
      tpu.vector_store %arg5[%c0_13, %c0_14, %c0_15], %28 {strides = array<i32>} : memref<1x4x256xf32, #tpu.memory_space<vmem>>, vector<1x4x256xf32>,
    } else {
    }
    return
  }
  func.func @transform_0(%arg0: i32, %arg1: i32, %arg2: i32) -> i32 {
    %c0_i32 = arith.constant 0 : i32
    %c0_i32_0 = arith.constant 0 : i32
    return %c0_i32 : i32
  }
  func.func @transform_1(%arg0: i32, %arg1: i32, %arg2: i32) -> (i32, i32, i32) {
    %c0_i32 = arith.constant 0 : i32
    %c0_i32_0 = arith.constant 0 : i32
    return %arg0, %c0_i32, %arg2 : i32, i32, i32
  }
  func.func @transform_2(%arg0: i32, %arg1: i32, %arg2: i32) -> (i32, i32, i32) {
    %0 = arith.muli %arg2, %arg1 : i32
    %c0_i32 = arith.constant 0 : i32
    %c0_i32_0 = arith.constant 0 : i32
    return %arg0, %c0_i32, %0 : i32, i32, i32
  }
}

</mosaic_0001>

<llo_original>
// kernel: tpu_custom_call.1
$region0: #{tpu_custom_call.1}
  #allocation0 [shape = 'u32[]', space=smem, size = 0x4, offset = 0x4, fixed_abs, tag = 'smem constant byte address 0x4 - core index']
  #allocation1 [shape = 'u32[144,128]{1,0:T(1,128)}', space=vmem, size = 0x12000, scoped, tag = 'internal scratch']
  #allocation2 [shape = 'f32[4,4]{1,0:T(4,128)}', space=vmem, size = 0x800, scoped, tag = 'scratch operand']
  #allocation3 [shape = 'f32[1]{0:T(128)S(6)}', space=smem, size = 0x200, scoped, tag = 'scoped memory for tpu_custom_call.1']
  %s0 = inlined_call_operand.<no memory space> [shape: f32[1], index: 0, kind: input, shape index: {}]
  %s1 = inlined_call_operand.hbm [shape: f32[2,4,256], index: 1, kind: input, shape index: {}]
  %s2 = inlined_call_operand.hbm [shape: f32[2,4,256], index: 2, kind: output, shape index: {}]
  %s3 = sld [smem:[#allocation0]]
  $region61: #{tpu_custom_call.1} parent=0
    _
  %s5 = ssub.s32 1, %s3
  %s6 = scalar_select 0, %s5, %s3
  %7 = sst [smem:[#allocation3]] %s0
  $region1: #{tpu_custom_call.1} parent=0
    #allocation4 [shape = 'u8[8192]{0}', space=vmem, size = 0x2000, scoped, tag = 'input window, operand 1']
    #allocation5 [shape = 's32[2]{0}', space=sflag, size = 0x8, scoped, tag = 'scoped memory for tpu_custom_call.1']
    #allocation6 [shape = 's32[2]{0}', space=sflag, size = 0x8, scoped, tag = 'scoped memory for tpu_custom_call.1']
    #allocation7 [shape = 'u8[8192]{0}', space=vmem, size = 0x2000, scoped, tag = 'output window, operand 0']
    %8 = vsyncpa [#allocation5], 0
    %s9 = scalar_lea.sflag [#allocation5], 1
    %10 = vsyncpa %s9, 0
    %11 = vsyncpa [#allocation6], 0
    %s12 = scalar_lea.sflag [#allocation6], 1
    %13 = vsyncpa %s12, 0
    loop: start=0, step=1, limit=6
    $region2: #{tpu_custom_call.1} parent=1 // loop_pre_header
      _
    $region3: #{tpu_custom_call.1} parent=1 // loop_header
      %s15 = sphi 0, %s19
      %p16 = scmp.ge.s32.totalorder %s15, 6
      %s22 = sphi 0, %s41
      %s23 = sphi 0, %s37
      %s24 = sphi 0, %s33
      %s25 = sphi 0, %s22
      %s26 = sphi 0, %s23
      %s27 = sphi 0, %s24
      %s28 = sphi 0, %s25
      %s29 = sphi 0, %s26
      %s30 = sphi 0, %s27
      %s42 = sphi 0, %s42
      %s44 = sphi 0, %s42
      %s45 = sphi 0, %s44
      %s59 = sphi 0, %s45
      %s67 = sphi 0, %s69
      %s70 = sphi 0, %s67
      %s71 = sphi 0, %s70
      %s87 = sphi 0, %s71
      %s97 = sphi 0, %s99
      %s100 = sphi 0, %s97
      %s101 = sphi 0, %s100
      %s117 = sphi 0, %s101
    $region4: #{tpu_custom_call.1} parent=1 // loop_header_branch
      %18 = sbr.rel (%p16) target = $region8
    $region5: #{tpu_custom_call.1} parent=1 // loop_body
      %s20 = ssub.s32 %s15, 1
      %s21 = ssub.s32 %s15, 2
      %s31 = sadd.s32 1, %s24
      %p32 = scmp.ge.s32.totalorder %s31, 1
      %s33 = scalar_select %p32, 0, %s31
      %s34 = sadd.s32 1, %s23
      %s35 = scalar_select %p32, %s34, %s23
      %p36 = scmp.ge.s32.totalorder %s35, 2
      %s37 = scalar_select %p36, 0, %s35
      %s38 = sadd.s32 1, %s22
      %s39 = scalar_select %p36, %s38, %s22
      %p40 = scmp.ge.s32.totalorder %s39, 2
      %s41 = scalar_select %p40, 0, %s39
      %s43 = sadd.s32 %s42, 1
      %p46 = scmp.eq.s32.totalorder %s15, 3
      %p47 = scmp.ne.s32.totalorder %s42, %s44
      %p48 = scmp.eq.s32.totalorder %s15, 0
      %p49 = por %p47, %p48
      %p50 = scmp.ne.s32.totalorder %s42, %s44
      %p51 = scmp.eq.s32.totalorder %s20, 3
      %p52 = por %p50, %p51
      %p53 = scmp.ne.s32.totalorder %s44, %s45
      %p54 = scmp.eq.s32.totalorder %s20, 0
      %p55 = por %p53, %p54
      %p56 = scmp.ne.s32.totalorder %s44, %s45
      %p57 = scmp.eq.s32.totalorder %s21, 3
      %p58 = por %p56, %p57
      %p60 = scmp.ne.s32.totalorder %s45, %s59
      %p61 = scmp.eq.s32.totalorder %s21, 0
      %p62 = por %p60, %p61
      %s63 = ssub.s32 %s22, %s41
      %s64 = ssub.s32 %s24, %s33
      %s65 = sor.u32 %s63, %s64
      %p66 = scmp.eq.s32.totalorder %s65, 0
      %s68 = sadd.s32 %s67, 1
      %s69 = scalar_select %p66, %s67, %s68
      %p72 = pneg %p66
      %p73 = scmp.eq.s32.totalorder %s15, 3
      %p74 = por %p72, %p73
      %p75 = scmp.ne.s32.totalorder %s67, %s70
      %p76 = scmp.eq.s32.totalorder %s15, 0
      %p77 = por %p75, %p76
      %p78 = scmp.ne.s32.totalorder %s67, %s70
      %p79 = scmp.eq.s32.totalorder %s20, 3
      %p80 = por %p78, %p79
      %p81 = scmp.ne.s32.totalorder %s70, %s71
      %p82 = scmp.eq.s32.totalorder %s20, 0
      %p83 = por %p81, %p82
      %p84 = scmp.ne.s32.totalorder %s70, %s71
      %p85 = scmp.eq.s32.totalorder %s21, 3
      %p86 = por %p84, %p85
      %p88 = scmp.ne.s32.totalorder %s71, %s87
      %p89 = scmp.eq.s32.totalorder %s21, 0
      %p90 = por %p88, %p89
      %s91 = smul.u32 %s24, %s23
      %s92 = smul.u32 %s33, %s37
      %s93 = ssub.s32 %s22, %s41
      %s94 = ssub.s32 %s91, %s92
      %s95 = sor.u32 %s93, %s94
      %p96 = scmp.eq.s32.totalorder %s95, 0
      %s98 = sadd.s32 %s97, 1
      %s99 = scalar_select %p96, %s97, %s98
      %p102 = pneg %p96
      %p103 = scmp.eq.s32.totalorder %s15, 3
      %p104 = por %p102, %p103
      %p105 = scmp.ne.s32.totalorder %s97, %s100
      %p106 = scmp.eq.s32.totalorder %s15, 0
      %p107 = por %p105, %p106
      %p108 = scmp.ne.s32.totalorder %s97, %s100
      %p109 = scmp.eq.s32.totalorder %s20, 3
      %p110 = por %p108, %p109
      %p111 = scmp.ne.s32.totalorder %s100, %s101
      %p112 = scmp.eq.s32.totalorder %s20, 0
      %p113 = por %p111, %p112
      %p114 = scmp.ne.s32.totalorder %s100, %s101
      %p115 = scmp.eq.s32.totalorder %s21, 3
      %p116 = por %p114, %p115
      %p118 = scmp.ne.s32.totalorder %s101, %s117
      %p119 = scmp.eq.s32.totalorder %s21, 0
      %p120 = por %p118, %p119
      %p121 = scmp.le.s32.totalorder 1, %s15
      %p122 = scmp.lt.s32.totalorder %s15, 5
      %p123 = pnand %p121, %p122
      %p124 = pneg %p123
      // Predicated region
      $region9: #{tpu_custom_call.1} parent=5 // pred_check
        _
      $region10: #{tpu_custom_call.1} parent=5 // pred_check_branch
        %126 = sbr.rel (%p123) target = $region12
      $region11: #{tpu_custom_call.1} parent=5 // pred_region
        %s127 = ssub.s32 %s15, 1
        // Predicated region
        $region13: #{tpu_custom_call.1} parent=11 // pred_check
          %p128 = pneg %p55
        $region14: #{tpu_custom_call.1} parent=11 // pred_check_branch
          %130 = sbr.rel (%p128) target = $region16
        $region15: #{tpu_custom_call.1} parent=11 // pred_region
          _
        $region16: #{tpu_custom_call.1} parent=11 // pred_fallthru
          _
      $region12: #{tpu_custom_call.1} parent=5 // pred_fallthru
        _
      %p131 = scmp.lt.s32.totalorder %s15, 4
      // Predicated region
      $region17: #{tpu_custom_call.1} parent=5 // pred_check
        %p132 = pneg %p131
      $region18: #{tpu_custom_call.1} parent=5 // pred_check_branch
        %134 = sbr.rel (%p132) target = $region20
      $region19: #{tpu_custom_call.1} parent=5 // pred_region
        // Predicated region
        $region21: #{tpu_custom_call.1} parent=19 // pred_check
          %p135 = pneg %p77
        $region22: #{tpu_custom_call.1} parent=19 // pred_check_branch
          %137 = sbr.rel (%p135) target = $region24
        $region23: #{tpu_custom_call.1} parent=19 // pred_region
          %s138 = sand.u32 %s67, 1
          %s139 = scalar_lea.sflag [#allocation5], %s138
          %s140 = sand.u32 %s67, 1
          %s141 = smul.addr %s140, 8
          %s142 = scalar_lea.vmem [#allocation4], %s141
          %s143 = smul.u32 2, %s24
          %s145 = ssub.s32 128, 128
          %146 = vsyncadd %s139, %s145
          %s147 = smul.addr %s22, 2
          %s148 = sadd.s32 %s143, %s147
          %s149 = smul.addr %s148, 64
          %s150 = scalar_lea.hbm %s1, %s149
          %s152 = sshll.u32 %s142, 4
          %s153 = int_to_ptr.vmem [resolvable:$true] %s152
          %155 = dma.hbm_to_vmem [thread:$0]  %s150, 128, %s153, %s139
        $region24: #{tpu_custom_call.1} parent=19 // pred_fallthru
          _
      $region20: #{tpu_custom_call.1} parent=5 // pred_fallthru
        _
      %p156 = scmp.le.s32.totalorder 1, %s15
      %p157 = scmp.lt.s32.totalorder %s15, 5
      %p158 = pnand %p156, %p157
      %p159 = pneg %p158
      // Predicated region
      $region25: #{tpu_custom_call.1} parent=5 // pred_check
        _
      $region26: #{tpu_custom_call.1} parent=5 // pred_check_branch
        %161 = sbr.rel (%p158) target = $region28
      $region27: #{tpu_custom_call.1} parent=5 // pred_region
        %s162 = ssub.s32 %s15, 1
        %s163 = sand.u32 %s70, 1
        %s164 = scalar_lea.sflag [#allocation5], %s163
        %s165 = sand.u32 %s70, 1
        %s166 = smul.addr %s165, 8
        %s167 = scalar_lea.vmem [#allocation4], %s166
        // Predicated region
        $region29: #{tpu_custom_call.1} parent=27 // pred_check
          %p168 = pneg %p83
        $region30: #{tpu_custom_call.1} parent=27 // pred_check_branch
          %170 = sbr.rel (%p168) target = $region32
        $region31: #{tpu_custom_call.1} parent=27 // pred_region
          %171 = dma.done %s164, 128
        $region32: #{tpu_custom_call.1} parent=27 // pred_fallthru
          _
        %p172 = pneg %p55
        %p173 = pneg %p52
        %s174 = sand.u32 %s70, 1
        %s175 = scalar_lea.sflag [#allocation5], %s174
        %s176 = sand.u32 %s70, 1
        %s177 = smul.addr %s176, 8
        %s178 = scalar_lea.vmem [#allocation4], %s177
        %p179 = pneg %p83
        %p180 = pneg %p80
        %p181 = pneg %p113
        %p182 = pneg %p110
        %s183 = sand.u32 %s100, 1
        %s184 = scalar_lea.sflag [#allocation6], %s183
        %s185 = sand.u32 %s100, 1
        %s186 = smul.addr %s185, 8
        %s187 = scalar_lea.vmem [#allocation7], %s186
        %s188 = smul.u32 2, %s27
        %s189 = smul.u32 %s27, %s26
        %s190 = smul.u32 2, %s189
        %v192 = vld [vmem:[%s167] sm:$0xff]
        %v194 = vcombine.high %v192, %v192
        %v196 = vpack.c.bf16 %v192, %v192
        %v197 = vpack.c.bf16 %v194, %v194
        %p198 = scmp.eq.s32.totalorder %s26, 0
        %p199 = scmp.eq.s32.totalorder %s27, 0
        %p200 = pnand %p198, %p199
        %p201 = pneg %p200
        // Predicated region
        $region33: #{tpu_custom_call.1} parent=27 // pred_check
          _
        $region34: #{tpu_custom_call.1} parent=27 // pred_check_branch
          %203 = sbr.rel (%p200) target = $region36
        $region35: #{tpu_custom_call.1} parent=27 // pred_region
          %vm204 = vcmask 27648
          %205 = vst.msk [vmem:[#allocation2] sm:$0xf] %vm204, 0.0
        $region36: #{tpu_custom_call.1} parent=27 // pred_fallthru
          _
        // Predicated region
        $region37: #{tpu_custom_call.1} parent=27 // pred_check
          %p206 = pneg %p198
        $region38: #{tpu_custom_call.1} parent=27 // pred_check_branch
          %208 = sbr.rel (%p206) target = $region40
        $region39: #{tpu_custom_call.1} parent=27 // pred_region
          %v209 = vld [vmem:[#allocation2] sm:$0xf]
          %210 = vmatprep.subr.bf16.mxu0 %v197
          %211 = vmatpush1.bf16.xpose.msra.mxu0 %v196
          %212 = vmatprep.subr.bf16.mxu0 0
          %213 = vmatpush1.bf16.xpose.msra.mxu0 0
          %214 = vmatprep.subr.bf16.mxu0 0
          %215 = vmatpush1.bf16.xpose.msra.mxu0 0
          %216 = vmatprep.subr.bf16.mxu0 0
          %217 = vmatpush1.bf16.xpose.msra.mxu0 0
          %218 = vmatprep.subr.bf16.mxu0 0
          %219 = vmatpush1.bf16.xpose.msra.mxu0 0
          %220 = vmatprep.subr.bf16.mxu0 0
          %221 = vmatpush1.bf16.xpose.msra.mxu0 0
          %222 = vmatprep.subr.bf16.mxu0 0
          %223 = vmatpush1.bf16.xpose.msra.mxu0 0
          %224 = vmatprep.subr.bf16.mxu0 0
          %225 = vmatpush1.bf16.xpose.msra.mxu0 0
          %226 = vmatprep.subr.bf16.mxu0 0
          %227 = vmatpush1.bf16.xpose.msra.mxu0 0
          %228 = vmatprep.subr.bf16.mxu0 0
          %229 = vmatpush1.bf16.xpose.msra.mxu0 0
          %230 = vmatprep.subr.bf16.mxu0 0
          %231 = vmatpush1.bf16.xpose.msra.mxu0 0
          %232 = vmatprep.subr.bf16.mxu0 0
          %233 = vmatpush1.bf16.xpose.msra.mxu0 0
          %234 = vmatprep.subr.bf16.mxu0 0
          %235 = vmatpush1.bf16.xpose.msra.mxu0 0
          %236 = vmatprep.subr.bf16.mxu0 0
          %237 = vmatpush1.bf16.xpose.msra.mxu0 0
          %238 = vmatprep.subr.bf16.mxu0 0
          %239 = vmatpush1.bf16.xpose.msra.mxu0 0
          %240 = vmatprep.subr.bf16.mxu0 0
          %241 = vmatpush1.bf16.xpose.msra.mxu0 0
          %242 = vmatprep.mubr.bf16.mxu0 %v197
          %243 = vmatmul.mubr.bf16.gmra.mrb[0].mxu0 %v196
          %v244 = vpop.f32.mrb[0].mxu0
          %v245 = vadd.f32 0.0, %v244
          %v246 = vpop.f32.mrb[0].mxu0
          %v247 = vpop.f32.mrb[0].mxu0
          %v248 = vpop.f32.mrb[0].mxu0
          %249 = vdwg.mxu0
          %v250 = vadd.f32 %v209, %v245
          %vm251 = vcmask 27648
          %252 = vst.msk [vmem:[#allocation2] sm:$0xf] %vm251, %v250
        $region40: #{tpu_custom_call.1} parent=27 // pred_fallthru
          _
        // Predicated region
        $region41: #{tpu_custom_call.1} parent=27 // pred_check
          _
        $region42: #{tpu_custom_call.1} parent=27 // pred_check_branch
          %254 = sbr.rel (%p200) target = $region44
        $region43: #{tpu_custom_call.1} parent=27 // pred_region
          %v255 = vld [vmem:[#allocation2] sm:$0xf]
          %vm256 = vcmask 27648
          %v257 = vsel %vm256, %v255, inf
          %258 = vmin.xlane.f32.xlu0 %v257
          %v259 = vpop.xlane.xlu0 %258
          %v260 = vsub.f32 %v259, %v255
          %v261 = vmul.f32 %v260, 1.442695
          %v262 = vpow.pop %v261
          %v263 = vsel %vm256, %v262, 0.0
          %264 = vadd.xlane.f32.xlu0 %v263
          %v265 = vpop.xlane.xlu0 %264
          %v266 = vrcp.pop %v265
          %v267 = vmul.f32 %v262, %v266
          %268 = vst.msk [vmem:[#allocation2] sm:$0xf] %vm256, %v267
        $region44: #{tpu_custom_call.1} parent=27 // pred_fallthru
          _
        %p269 = scmp.eq.s32.totalorder %s26, 1
        // Predicated region
        $region45: #{tpu_custom_call.1} parent=27 // pred_check
          %p270 = pneg %p269
        $region46: #{tpu_custom_call.1} parent=27 // pred_check_branch
          %272 = sbr.rel (%p270) target = $region48
        $region47: #{tpu_custom_call.1} parent=27 // pred_region
          %v273 = vld [vmem:[#allocation2] sm:$0xf]
          %v274 = vpack.c.bf16 %v273, %v273
          %vm275 = vcmask 31744
          %v277 = vsel %vm275, %v274, 0
          %vm279 = vcmask 1041408
          %v281 = vsel %vm279, %v196, 0
          %v284 = vsel %vm279, %v197, 0
          %286 = vmatprep.subr.bf16.mxu0 %v284
          %287 = vmatpush1.bf16.msra.mxu0 %v281
          %288 = vmatprep.subr.bf16.mxu0 0
          %289 = vmatpush1.bf16.msra.mxu0 0
          %290 = vmatprep.subr.bf16.mxu0 0
          %291 = vmatpush1.bf16.msra.mxu0 0
          %292 = vmatprep.subr.bf16.mxu0 0
          %293 = vmatpush1.bf16.msra.mxu0 0
          %294 = vmatprep.subr.bf16.mxu0 0
          %295 = vmatpush1.bf16.msra.mxu0 0
          %296 = vmatprep.subr.bf16.mxu0 0
          %297 = vmatpush1.bf16.msra.mxu0 0
          %298 = vmatprep.subr.bf16.mxu0 0
          %299 = vmatpush1.bf16.msra.mxu0 0
          %300 = vmatprep.subr.bf16.mxu0 0
          %301 = vmatpush1.bf16.msra.mxu0 0
          %302 = vmatprep.subr.bf16.mxu0 0
          %303 = vmatpush1.bf16.msra.mxu0 0
          %304 = vmatprep.subr.bf16.mxu0 0
          %305 = vmatpush1.bf16.msra.mxu0 0
          %306 = vmatprep.subr.bf16.mxu0 0
          %307 = vmatpush1.bf16.msra.mxu0 0
          %308 = vmatprep.subr.bf16.mxu0 0
          %309 = vmatpush1.bf16.msra.mxu0 0
          %310 = vmatprep.subr.bf16.mxu0 0
          %311 = vmatpush1.bf16.msra.mxu0 0
          %312 = vmatprep.subr.bf16.mxu0 0
          %313 = vmatpush1.bf16.msra.mxu0 0
          %314 = vmatprep.subr.bf16.mxu0 0
          %315 = vmatpush1.bf16.msra.mxu0 0
          %316 = vmatprep.subr.bf16.mxu0 0
          %317 = vmatpush1.bf16.msra.mxu0 0
          %318 = vmatprep.mubr.bf16.mxu0 0
          %319 = vmatmul.mubr.bf16.gmra.mrb[0].mxu0 %v277
          %v320 = vpop.f32.mrb[0].mxu0
          %v321 = vadd.f32 0.0, %v320
          %v322 = vpop.f32.mrb[0].mxu0
          %v323 = vadd.f32 0.0, %v322
          %v324 = vpop.f32.mrb[0].mxu0
          %v325 = vpop.f32.mrb[0].mxu0
          %326 = vdwg.mxu0
          %s327 = sld [smem:[#allocation3]]
          %v328 = vstv %s327
          %v329 = vmul.f32 %v328, %v321
          %v330 = vmul.f32 %v328, %v323
          %v331 = vadd.f32 %v329, %v192
          %v332 = vadd.f32 %v330, %v194
          %v335 = vcombine.low %v331, %v332
          %337 = vst [vmem:[%s187] sm:$0xff] %v335
        $region48: #{tpu_custom_call.1} parent=27 // pred_fallthru
          _
        %s338 = sand.u32 %s100, 1
        %s339 = scalar_lea.sflag [#allocation6], %s338
        %s340 = sand.u32 %s100, 1
        %s341 = smul.addr %s340, 8
        %s342 = scalar_lea.vmem [#allocation7], %s341
        // Predicated region
        $region49: #{tpu_custom_call.1} parent=27 // pred_check
          %p343 = pneg %p110
        $region50: #{tpu_custom_call.1} parent=27 // pred_check_branch
          %345 = sbr.rel (%p343) target = $region52
        $region51: #{tpu_custom_call.1} parent=27 // pred_region
          %s346 = smul.u32 %s27, %s26
          %s347 = smul.u32 2, %s346
          %s349 = ssub.s32 128, 128
          %350 = vsyncadd %s339, %s349
          %s351 = smul.addr %s25, 2
          %s352 = sadd.s32 %s347, %s351
          %s353 = smul.addr %s352, 64
          %s354 = scalar_lea.hbm %s2, %s353
          %s356 = sshll.u32 %s342, 4
          %s357 = int_to_ptr.vmem [resolvable:$true] %s356
          %359 = dma.vmem_to_hbm [thread:$0]  %s357, 128, %s354, %s339
        $region52: #{tpu_custom_call.1} parent=27 // pred_fallthru
          _
      $region28: #{tpu_custom_call.1} parent=5 // pred_fallthru
        _
      %p360 = scmp.le.s32.totalorder 2, %s15
      // Predicated region
      $region53: #{tpu_custom_call.1} parent=5 // pred_check
        %p361 = pneg %p360
      $region54: #{tpu_custom_call.1} parent=5 // pred_check_branch
        %363 = sbr.rel (%p361) target = $region56
      $region55: #{tpu_custom_call.1} parent=5 // pred_region
        %s364 = ssub.s32 %s15, 2
        // Predicated region
        $region57: #{tpu_custom_call.1} parent=55 // pred_check
          %p365 = pneg %p116
        $region58: #{tpu_custom_call.1} parent=55 // pred_check_branch
          %367 = sbr.rel (%p365) target = $region60
        $region59: #{tpu_custom_call.1} parent=55 // pred_region
          %s368 = sand.u32 %s101, 1
          %s369 = scalar_lea.sflag [#allocation6], %s368
          %s370 = sand.u32 %s101, 1
          %s371 = smul.addr %s370, 8
          %s372 = scalar_lea.vmem [#allocation7], %s371
          %373 = dma.done %s369, 128
        $region60: #{tpu_custom_call.1} parent=55 // pred_fallthru
          _
      $region56: #{tpu_custom_call.1} parent=5 // pred_fallthru
        _
    $region6: #{tpu_custom_call.1} parent=1 // loop_footer
      %s19 = sadd.s32 1, %s15
    $region7: #{tpu_custom_call.1} parent=1 // loop_footer_branch
      %14 = sbr.rel target = $region3
    $region8: #{tpu_custom_call.1} parent=1 // loop_exit
      _
    %374 = vsyncpa [#allocation5], 1
    %s375 = scalar_lea.sflag [#allocation5], 1
    %376 = vsyncpa %s375, 1
    %377 = vsyncpa [#allocation6], 1
    %s378 = scalar_lea.sflag [#allocation6], 1
    %379 = vsyncpa %s378, 1

</llo_original>
